<compile_context>
chip_gen: v7x
topology: tpu7x:2x2x1
jax: 0.10.0
libtpu: 0.0.40
codegen_flags: <defaults>
</compile_context>

<pallas_src>
import functools

import jax
import jax.numpy as jnp
from jax.experimental import pallas as pl
from jax.experimental.pallas import tpu as pltpu


def _round_up(n: int, m: int) -> int:
    return ((n + m - 1) // m) * m


def parnet_decoder_kernel(x_ref, w_ref, b_ref, o_ref, acc_ref, *, inv_hw):
    """One grid step.

    x_ref  : (TB, THW, Cp)   streamed activation tile (batch, spatial, channel)
    w_ref  : (Cp, NCp)       linear weight (channels -> classes), f32
    b_ref  : (1, NCp)        bias, f32 (-inf in padded class columns)
    o_ref  : (TB, NCp)       output probabilities (same block for all k)
    acc_ref: (TB, Cp) f32    running spatial-sum accumulator
    """
    k = pl.program_id(1)

    @pl.when(k == 0)
    def _():
        acc_ref[...] = jnp.zeros_like(acc_ref)

    # Partial spatial sum over this tile, accumulated in f32 without
    # materializing an f32 copy of the streamed (possibly bf16) tile.
    acc_ref[...] += jnp.sum(x_ref[...], axis=1, dtype=jnp.float32)

    @pl.when(k == pl.num_programs(1) - 1)
    def _():
        # Adaptive average pool: single scale on the small accumulator.
        pooled = acc_ref[...] * inv_hw                              # (TB, Cp)

        # Linear layer on the MXU.
        logits = jnp.dot(pooled, w_ref[...],
                         preferred_element_type=jnp.float32)
        logits = logits + b_ref[...]                                # (TB, NCp)

        # Numerically stable softmax over the class axis.
        m = jnp.max(logits, axis=-1, keepdims=True)
        e = jnp.exp(logits - m)
        denom = jnp.sum(e, axis=-1, keepdims=True)
        probs = e * pl.reciprocal(denom, approx=True)               # EUP slot

        o_ref[...] = probs.astype(o_ref.dtype)


def parnet_decoder(x_nchw, weight, bias, *, tb=8, x_tile_budget_bytes=8 << 20):
    """Forward pass of ParNetDecoder.

    x_nchw : (B, C, H, W)
    weight : (n_classes, C)   [PyTorch nn.Linear layout]
    bias   : (n_classes,)
    returns: (B, n_classes) softmax probabilities, dtype of x_nchw.
    """
    B, C, H, W = x_nchw.shape
    n_classes = weight.shape[0]
    HW = H * W

    # ---- layout: channels on the 128-lane axis --------------------------
    x = jnp.transpose(x_nchw, (0, 2, 3, 1)).reshape(B, HW, C)   # (B, HW, C)

    # ---- padded sizes ----------------------------------------------------
    Cp = _round_up(C, 128)            # lane-dense channels (zero pad)
    NCp = _round_up(n_classes, 128)   # lane-dense classes (zero W, -inf bias)
    Bp = _round_up(B, tb)             # batch padded to the batch tile

    # ---- spatial tile: biggest tile under a double-buffered VMEM budget --
    elem = x.dtype.itemsize
    max_thw = x_tile_budget_bytes // (2 * tb * Cp * elem)       # 2x: dbl buffer
    max_thw = max(8, (max_thw // 8) * 8)
    THW = min(_round_up(HW, 8), max_thw)
    HWp = _round_up(HW, THW)

    # ---- host-side padding (zeros don't perturb the sum / matmul) --------
    x = jnp.pad(x, ((0, Bp - B), (0, HWp - HW), (0, Cp - C)))
    w = jnp.pad(weight.T.astype(jnp.float32),
                ((0, Cp - C), (0, NCp - n_classes)))
    b = jnp.pad(bias.astype(jnp.float32), (0, NCp - n_classes),
                constant_values=-jnp.inf).reshape(1, NCp)

    grid = (Bp // tb, HWp // THW)
    kernel = functools.partial(parnet_decoder_kernel, inv_hw=1.0 / float(HW))

    out = pl.pallas_call(
        kernel,
        out_shape=jax.ShapeDtypeStruct((Bp, NCp), x_nchw.dtype),
        grid_spec=pltpu.PrefetchScalarGridSpec(
            num_scalar_prefetch=0,
            grid=grid,
            in_specs=[
                # Streamed activation: new block every (batch, spatial) step.
                pl.BlockSpec((tb, THW, Cp), lambda bi, ki: (bi, ki, 0)),
                # Weights / bias: resident, same block every step.
                pl.BlockSpec((Cp, NCp), lambda bi, ki: (0, 0)),
                pl.BlockSpec((1, NCp), lambda bi, ki: (0, 0)),
            ],
            # Output block depends only on the batch tile (accumulator-style).
            out_specs=pl.BlockSpec((tb, NCp), lambda bi, ki: (bi, 0)),
            scratch_shapes=[pltpu.VMEM((tb, Cp), jnp.float32)],
        ),
        compiler_params=pltpu.CompilerParams(
            dimension_semantics=("parallel", "arbitrary"),
            vmem_limit_bytes=32 * 1024 * 1024,
        ),
    )(x, w, b)

    return out[:B, :n_classes]


def reference(x_nchw, weight, bias):
    pooled = jnp.mean(x_nchw.astype(jnp.float32), axis=(2, 3))     # (B, C)
    logits = pooled @ weight.T.astype(jnp.float32) + bias.astype(jnp.float32)
    return jax.nn.softmax(logits, axis=1)


if __name__ == "__main__":
    B, C, H, W = 2, 4, 16, 16
    n_classes = 8

    key = jax.random.PRNGKey(0)
    kx, kw, kb = jax.random.split(key, 3)

    x = jax.random.normal(kx, (B, C, H, W), dtype=jnp.float32)
    # Deterministic synthetic Linear params (PyTorch layout: (out, in) weight).
    bound = 1.0 / (C ** 0.5)
    weight = jax.random.uniform(kw, (n_classes, C), minval=-bound, maxval=bound,
                                dtype=jnp.float32)
    bias = jax.random.uniform(kb, (n_classes,), minval=-bound, maxval=bound,
                              dtype=jnp.float32)

    out = parnet_decoder(x, weight, bias)
    out = jax.block_until_ready(out)

    ref = reference(x, weight, bias)
    assert out.shape == (B, n_classes)
    # approx=True reciprocal -> slightly relaxed tolerance.
    assert jnp.allclose(out, ref, atol=2e-3, rtol=2e-3), "mismatch vs reference"
    assert jnp.allclose(jnp.sum(out, axis=1), 1.0, atol=2e-3), \
        "softmax rows must sum to 1"

    print("KERNEL_OK")
</pallas_src>

<mosaic_0001>
module attributes {stable_mosaic.version = 11 : i64} {
  func.func @parnet_decoder_kernel(%arg0: i32, %arg1: i32, %arg2: memref<8x256x128xf32, #tpu.memory_space<vmem>>, %arg3: memref<128x128xf32, #tpu.memory_space<vmem>>, %arg4: memref<1x128xf32, #tpu.memory_space<vmem>>, %arg5: memref<8x128xf32, #tpu.memory_space<vmem>>, %arg6: memref<8x128xf32, #tpu.memory_space<vmem>>) attributes {dimension_semantics = [#tpu.dimension_semantics<parallel>, #tpu.dimension_semantics<arbitrary>], iteration_bounds = array<i64: 1, 1>, scalar_prefetch = 0 : i64, scratch_operands = 1 : i64, tpu.core_type = #tpu.core_type<tc>, window_params = [{transform_indices = @transform_0, window_bounds = array<i64: 8, 256, 128>}, {pipeline_mode = #tpu.pipeline_mode<synchronous>, transform_indices = @transform_1, window_bounds = array<i64: 128, 128>}, {pipeline_mode = #tpu.pipeline_mode<synchronous>, transform_indices = @transform_2, window_bounds = array<i64: 1, 128>}, {transform_indices = @transform_3, window_bounds = array<i64: 8, 128>}]} {
    %c0_i32 = arith.constant 0 : i32
    %0 = arith.cmpi eq, %arg1, %c0_i32 : i32
    %1 = arith.extui %0 : i1 to i32
    %c0_i32_0 = arith.constant 0 : i32
    %2 = arith.cmpi ne, %1, %c0_i32_0 : i32
    scf.if %2 {
      %cst_9 = arith.constant 0.000000e+00 : f32
      %11 = vector.broadcast %cst_9 : f32 to vector<8x128xf32>
      %c0_10 = arith.constant 0 : index
      %c0_11 = arith.constant 0 : index
      %12 = vector.load %arg6[%c0_10, %c0_11] : memref<8x128xf32, #tpu.memory_space<vmem>>, vector<8x128xf32>
      tpu.vector_store %arg6[%c0_10, %c0_11], %11 {strides = array<i32>} : memref<8x128xf32, #tpu.memory_space<vmem>>, vector<8x128xf32>,
    } else {
    }
    %c0 = arith.constant 0 : index
    %c0_1 = arith.constant 0 : index
    %3 = vector.load %arg6[%c0, %c0_1] : memref<8x128xf32, #tpu.memory_space<vmem>>, vector<8x128xf32>
    %c0_2 = arith.constant 0 : index
    %c0_3 = arith.constant 0 : index
    %c0_4 = arith.constant 0 : index
    %4 = vector.load %arg2[%c0_2, %c0_3, %c0_4] : memref<8x256x128xf32, #tpu.memory_space<vmem>>, vector<8x256x128xf32>
    %cst = arith.constant dense<0.000000e+00> : vector<8x128xf32>
    %5 = vector.multi_reduction <add>, %4, %cst [1] : vector<8x256x128xf32> to vector<8x128xf32>
    %6 = arith.addf %3, %5 : vector<8x128xf32>
    %c0_5 = arith.constant 0 : index
    %c0_6 = arith.constant 0 : index
    %7 = vector.load %arg6[%c0_5, %c0_6] : memref<8x128xf32, #tpu.memory_space<vmem>>, vector<8x128xf32>
    tpu.vector_store %arg6[%c0_5, %c0_6], %6 {strides = array<i32>} : memref<8x128xf32, #tpu.memory_space<vmem>>, vector<8x128xf32>,
    %c0_i32_7 = arith.constant 0 : i32
    %8 = arith.cmpi eq, %arg1, %c0_i32_7 : i32
    %9 = arith.extui %8 : i1 to i32
    %c0_i32_8 = arith.constant 0 : i32
    %10 = arith.cmpi ne, %9, %c0_i32_8 : i32
    scf.if %10 {
      %c0_9 = arith.constant 0 : index
      %c0_10 = arith.constant 0 : index
      %11 = vector.load %arg6[%c0_9, %c0_10] : memref<8x128xf32, #tpu.memory_space<vmem>>, vector<8x128xf32>
      %cst_11 = arith.constant 3.906250e-03 : f32
      %12 = vector.broadcast %cst_11 : f32 to vector<8x128xf32>
      %13 = arith.mulf %11, %12 : vector<8x128xf32>
      %c0_12 = arith.constant 0 : index
      %c0_13 = arith.constant 0 : index
      %14 = vector.load %arg3[%c0_12, %c0_13] : memref<128x128xf32, #tpu.memory_space<vmem>>, vector<128x128xf32>
      %cst_14 = arith.constant dense<0.000000e+00> : vector<8x128xf32>
      %15 = tpu.matmul %13, %14, %cst_14 {dimension_numbers = #tpu.dot_dimension_numbers<[1], [0], [0], [1], [0, 0, 1, 1], [], []>} : vector<8x128xf32>, vector<128x128xf32>, vector<8x128xf32> -> vector<8x128xf32>
      %c0_15 = arith.constant 0 : index
      %c0_16 = arith.constant 0 : index
      %16 = vector.load %arg4[%c0_15, %c0_16] : memref<1x128xf32, #tpu.memory_space<vmem>>, vector<1x128xf32>
      %17 = vector.broadcast %16 : vector<1x128xf32> to vector<8x128xf32>
      %18 = arith.addf %15, %17 : vector<8x128xf32>
      %cst_17 = arith.constant dense<0xFF800000> : vector<8xf32>
      %19 = vector.multi_reduction <maximumf>, %18, %cst_17 [1] : vector<8x128xf32> to vector<8xf32>
      %20 = vector.shape_cast %19 : vector<8xf32> to vector<8x1xf32>
      %21 = vector.broadcast %20 : vector<8x1xf32> to vector<8x128xf32>
      %22 = arith.subf %18, %21 : vector<8x128xf32>
      %23 = math.exp %22 : vector<8x128xf32>
      %cst_18 = arith.constant dense<0.000000e+00> : vector<8xf32>
      %24 = vector.multi_reduction <add>, %23, %cst_18 [1] : vector<8x128xf32> to vector<8xf32>
      %25 = vector.shape_cast %24 : vector<8xf32> to vector<8x1xf32>
      %26 = tpu.reciprocal %25 {approx = true} : vector<8x1xf32> -> vector<8x1xf32>
      %27 = vector.broadcast %26 : vector<8x1xf32> to vector<8x128xf32>
      %28 = arith.mulf %23, %27 : vector<8x128xf32>
      %c0_19 = arith.constant 0 : index
      %c0_20 = arith.constant 0 : index
      %29 = vector.load %arg5[%c0_19, %c0_20] : memref<8x128xf32, #tpu.memory_space<vmem>>, vector<8x128xf32>
      tpu.vector_store %arg5[%c0_19, %c0_20], %28 {strides = array<i32>} : memref<8x128xf32, #tpu.memory_space<vmem>>, vector<8x128xf32>,
    } else {
    }
    return
  }
  func.func @transform_0(%arg0: i32, %arg1: i32) -> (i32, i32, i32) {
    %c0_i32 = arith.constant 0 : i32
    %c0_i32_0 = arith.constant 0 : i32
    return %arg0, %arg1, %c0_i32 : i32, i32, i32
  }
  func.func @transform_1(%arg0: i32, %arg1: i32) -> (i32, i32) {
    %c0_i32 = arith.constant 0 : i32
    %c0_i32_0 = arith.constant 0 : i32
    %c0_i32_1 = arith.constant 0 : i32
    return %c0_i32, %c0_i32_0 : i32, i32
  }
  func.func @transform_2(%arg0: i32, %arg1: i32) -> (i32, i32) {
    %c0_i32 = arith.constant 0 : i32
    %c0_i32_0 = arith.constant 0 : i32
    %c0_i32_1 = arith.constant 0 : i32
    return %c0_i32, %c0_i32_0 : i32, i32
  }
  func.func @transform_3(%arg0: i32, %arg1: i32) -> (i32, i32) {
    %c0_i32 = arith.constant 0 : i32
    %c0_i32_0 = arith.constant 0 : i32
    return %arg0, %c0_i32 : i32, i32
  }
}

</mosaic_0001>

<llo_original>
// kernel: tpu_custom_call.1
$region0: #{tpu_custom_call.1}
  #allocation0 [shape = 'u32[]', space=smem, size = 0x4, offset = 0x4, fixed_abs, tag = 'smem constant byte address 0x4 - core index']
  #allocation1 [shape = 'u32[144,128]{1,0:T(1,128)}', space=vmem, size = 0x12000, scoped, tag = 'internal scratch']
  #allocation2 [shape = 'f32[8,128]{1,0:T(8,128)}', space=vmem, size = 0x1000, scoped, tag = 'scratch operand']
  %s0 = inlined_call_operand.hbm [shape: f32[8,256,128], index: 0, kind: input, shape index: {}]
  %s1 = inlined_call_operand.hbm [shape: f32[128,128], index: 1, kind: input, shape index: {}]
  %s2 = inlined_call_operand.vmem [shape: f32[1,128], index: 2, kind: input, shape index: {}]
  %s3 = inlined_call_operand.hbm [shape: f32[8,128], index: 3, kind: output, shape index: {}]
  %s4 = sld [smem:[#allocation0]]
  $region38: #{tpu_custom_call.1} parent=0
    _
  %s6 = ssub.s32 1, %s4
  %s7 = scalar_select 0, %s6, %s4
  $region1: #{tpu_custom_call.1} parent=0
    #allocation3 [shape = 'u8[1048576]{0}', space=vmem, size = 0x100000, scoped, tag = 'input window, operand 0, single buffered']
    #allocation4 [shape = 's32[1]{0}', space=sflag, size = 0x4, scoped, tag = 'scoped memory for tpu_custom_call.1']
    #allocation5 [shape = 's32[1]{0}', space=sflag, size = 0x4, scoped, tag = 'scoped memory for tpu_custom_call.1']
    #allocation6 [shape = 'u8[65536]{0}', space=vmem, size = 0x10000, scoped, tag = 'input window, operand 1, single buffered']
    #allocation7 [shape = 's32[1]{0}', space=sflag, size = 0x4, scoped, tag = 'scoped memory for tpu_custom_call.1']
    #allocation8 [shape = 'u8[4096]{0}', space=vmem, size = 0x1000, scoped, tag = 'output window, operand 0, single buffered']
    %8 = vsyncpa [#allocation4], 0
    %9 = vsyncpa [#allocation7], 0
    %10 = vsyncpa [#allocation5], 0
    // Predicated region
    $region2: #{tpu_custom_call.1} parent=1 // pred_check
      _
    $region3: #{tpu_custom_call.1} parent=1 // pred_check_branch
      %12 = sbr.rel (0) target = $region5
    $region4: #{tpu_custom_call.1} parent=1 // pred_region
      %s14 = ssub.s32 32768, 32768
      %15 = vsyncadd [#allocation4], %s14
      %s16 = sshll.u32 [#allocation3], 4
      %s17 = int_to_ptr.vmem [resolvable:$true] %s16
      %22 = dma.hbm_to_vmem [thread:$0]  %s0, 32768, %s17, [#allocation4], 128, 128, 8
    $region5: #{tpu_custom_call.1} parent=1 // pred_fallthru
      _
    // Predicated region
    $region6: #{tpu_custom_call.1} parent=1 // pred_check
      _
    $region7: #{tpu_custom_call.1} parent=1 // pred_check_branch
      %24 = sbr.rel (0) target = $region9
    $region8: #{tpu_custom_call.1} parent=1 // pred_region
      %s26 = ssub.s32 2048, 2048
      %27 = vsyncadd [#allocation7], %s26
      %s28 = sshll.u32 [#allocation6], 4
      %s29 = int_to_ptr.vmem [resolvable:$true] %s28
      %34 = dma.hbm_to_vmem [thread:$0]  %s1, 2048, %s29, [#allocation7], 128, 128, 8
    $region9: #{tpu_custom_call.1} parent=1 // pred_fallthru
      _
    // Predicated region
    $region10: #{tpu_custom_call.1} parent=1 // pred_check
      _
    $region11: #{tpu_custom_call.1} parent=1 // pred_check_branch
      %36 = sbr.rel (0) target = $region13
    $region12: #{tpu_custom_call.1} parent=1 // pred_region
      _
    $region13: #{tpu_custom_call.1} parent=1 // pred_fallthru
      _
    // Predicated region
    $region14: #{tpu_custom_call.1} parent=1 // pred_check
      _
    $region15: #{tpu_custom_call.1} parent=1 // pred_check_branch
      %38 = sbr.rel (0) target = $region17
    $region16: #{tpu_custom_call.1} parent=1 // pred_region
      %39 = dma.done [#allocation4], 32768
    $region17: #{tpu_custom_call.1} parent=1 // pred_fallthru
      _
    // Predicated region
    $region18: #{tpu_custom_call.1} parent=1 // pred_check
      _
    $region19: #{tpu_custom_call.1} parent=1 // pred_check_branch
      %41 = sbr.rel (0) target = $region21
    $region20: #{tpu_custom_call.1} parent=1 // pred_region
      %42 = dma.done [#allocation7], 2048
    $region21: #{tpu_custom_call.1} parent=1 // pred_fallthru
      _
    %p43 = scmp.eq.s32.totalorder 0, 0
    // Predicated region
    $region22: #{tpu_custom_call.1} parent=1 // pred_check
      %p44 = pneg %p43
    $region23: #{tpu_custom_call.1} parent=1 // pred_check_branch
      %46 = sbr.rel (%p44) target = $region25
    $region24: #{tpu_custom_call.1} parent=1 // pred_region
      %47 = vst [vmem:[#allocation2] sm:$0xff] 0.0
    $region25: #{tpu_custom_call.1} parent=1 // pred_fallthru
      _
    %v48 = vld [vmem:[#allocation2] sm:$0xff]
    %v49 = vld [vmem:[#allocation3] sm:$0xff]
    %v50 = vld [vmem:[#allocation3 + $0x8] sm:$0xff]
    %v51 = vld [vmem:[#allocation3 + $0x10] sm:$0xff]
    %v52 = vld [vmem:[#allocation3 + $0x18] sm:$0xff]
    %v53 = vld [vmem:[#allocation3 + $0x20] sm:$0xff]
    %v54 = vld [vmem:[#allocation3 + $0x28] sm:$0xff]
    %v55 = vld [vmem:[#allocation3 + $0x30] sm:$0xff]
    %v56 = vld [vmem:[#allocation3 + $0x38] sm:$0xff]
    %v57 = vld [vmem:[#allocation3 + $0x40] sm:$0xff]
    %v58 = vld [vmem:[#allocation3 + $0x48] sm:$0xff]
    %v59 = vld [vmem:[#allocation3 + $0x50] sm:$0xff]
    %v60 = vld [vmem:[#allocation3 + $0x58] sm:$0xff]
    %v61 = vld [vmem:[#allocation3 + $0x60] sm:$0xff]
    %v62 = vld [vmem:[#allocation3 + $0x68] sm:$0xff]
    %v63 = vld [vmem:[#allocation3 + $0x70] sm:$0xff]
    %v64 = vld [vmem:[#allocation3 + $0x78] sm:$0xff]
    %v65 = vld [vmem:[#allocation3 + $0x80] sm:$0xff]
    %v66 = vld [vmem:[#allocation3 + $0x88] sm:$0xff]
    %v67 = vld [vmem:[#allocation3 + $0x90] sm:$0xff]
    %v68 = vld [vmem:[#allocation3 + $0x98] sm:$0xff]
    %v69 = vld [vmem:[#allocation3 + $0xa0] sm:$0xff]
    %v70 = vld [vmem:[#allocation3 + $0xa8] sm:$0xff]
    %v71 = vld [vmem:[#allocation3 + $0xb0] sm:$0xff]
    %v72 = vld [vmem:[#allocation3 + $0xb8] sm:$0xff]
    %v73 = vld [vmem:[#allocation3 + $0xc0] sm:$0xff]
    %v74 = vld [vmem:[#allocation3 + $0xc8] sm:$0xff]
    %v75 = vld [vmem:[#allocation3 + $0xd0] sm:$0xff]
    %v76 = vld [vmem:[#allocation3 + $0xd8] sm:$0xff]
    %v77 = vld [vmem:[#allocation3 + $0xe0] sm:$0xff]
    %v78 = vld [vmem:[#allocation3 + $0xe8] sm:$0xff]
    %v79 = vld [vmem:[#allocation3 + $0xf0] sm:$0xff]
    %v80 = vld [vmem:[#allocation3 + $0xf8] sm:$0xff]
    %v81 = vld [vmem:[#allocation3 + $0x100] sm:$0xff]
    %v82 = vld [vmem:[#allocation3 + $0x108] sm:$0xff]
    %v83 = vld [vmem:[#allocation3 + $0x110] sm:$0xff]
    %v84 = vld [vmem:[#allocation3 + $0x118] sm:$0xff]
    %v85 = vld [vmem:[#allocation3 + $0x120] sm:$0xff]
    %v86 = vld [vmem:[#allocation3 + $0x128] sm:$0xff]
    %v87 = vld [vmem:[#allocation3 + $0x130] sm:$0xff]
    %v88 = vld [vmem:[#allocation3 + $0x138] sm:$0xff]
    %v89 = vld [vmem:[#allocation3 + $0x140] sm:$0xff]
    %v90 = vld [vmem:[#allocation3 + $0x148] sm:$0xff]
    %v91 = vld [vmem:[#allocation3 + $0x150] sm:$0xff]
    %v92 = vld [vmem:[#allocation3 + $0x158] sm:$0xff]
    %v93 = vld [vmem:[#allocation3 + $0x160] sm:$0xff]
    %v94 = vld [vmem:[#allocation3 + $0x168] sm:$0xff]
    %v95 = vld [vmem:[#allocation3 + $0x170] sm:$0xff]
    %v96 = vld [vmem:[#allocation3 + $0x178] sm:$0xff]
    %v97 = vld [vmem:[#allocation3 + $0x180] sm:$0xff]
    %v98 = vld [vmem:[#allocation3 + $0x188] sm:$0xff]
    %v99 = vld [vmem:[#allocation3 + $0x190] sm:$0xff]
    %v100 = vld [vmem:[#allocation3 + $0x198] sm:$0xff]
    %v101 = vld [vmem:[#allocation3 + $0x1a0] sm:$0xff]
    %v102 = vld [vmem:[#allocation3 + $0x1a8] sm:$0xff]
    %v103 = vld [vmem:[#allocation3 + $0x1b0] sm:$0xff]
    %v104 = vld [vmem:[#allocation3 + $0x1b8] sm:$0xff]
    %v105 = vld [vmem:[#allocation3 + $0x1c0] sm:$0xff]
    %v106 = vld [vmem:[#allocation3 + $0x1c8] sm:$0xff]
    %v107 = vld [vmem:[#allocation3 + $0x1d0] sm:$0xff]
    %v108 = vld [vmem:[#allocation3 + $0x1d8] sm:$0xff]
    %v109 = vld [vmem:[#allocation3 + $0x1e0] sm:$0xff]
    %v110 = vld [vmem:[#allocation3 + $0x1e8] sm:$0xff]
    %v111 = vld [vmem:[#allocation3 + $0x1f0] sm:$0xff]
    %v112 = vld [vmem:[#allocation3 + $0x1f8] sm:$0xff]
    %v113 = vld [vmem:[#allocation3 + $0x200] sm:$0xff]
    %v114 = vld [vmem:[#allocation3 + $0x208] sm:$0xff]
    %v115 = vld [vmem:[#allocation3 + $0x210] sm:$0xff]
    %v116 = vld [vmem:[#allocation3 + $0x218] sm:$0xff]
    %v117 = vld [vmem:[#allocation3 + $0x220] sm:$0xff]
    %v118 = vld [vmem:[#allocation3 + $0x228] sm:$0xff]
    %v119 = vld [vmem:[#allocation3 + $0x230] sm:$0xff]
    %v120 = vld [vmem:[#allocation3 + $0x238] sm:$0xff]
    %v121 = vld [vmem:[#allocation3 + $0x240] sm:$0xff]
    %v122 = vld [vmem:[#allocation3 + $0x248] sm:$0xff]
    %v123 = vld [vmem:[#allocation3 + $0x250] sm:$0xff]
    %v124 = vld [vmem:[#allocation3 + $0x258] sm:$0xff]
    %v125 = vld [vmem:[#allocation3 + $0x260] sm:$0xff]
    %v126 = vld [vmem:[#allocation3 + $0x268] sm:$0xff]
    %v127 = vld [vmem:[#allocation3 + $0x270] sm:$0xff]
    %v128 = vld [vmem:[#allocation3 + $0x278] sm:$0xff]
    %v129 = vld [vmem:[#allocation3 + $0x280] sm:$0xff]
    %v130 = vld [vmem:[#allocation3 + $0x288] sm:$0xff]
    %v131 = vld [vmem:[#allocation3 + $0x290] sm:$0xff]
    %v132 = vld [vmem:[#allocation3 + $0x298] sm:$0xff]
    %v133 = vld [vmem:[#allocation3 + $0x2a0] sm:$0xff]
    %v134 = vld [vmem:[#allocation3 + $0x2a8] sm:$0xff]
    %v135 = vld [vmem:[#allocation3 + $0x2b0] sm:$0xff]
    %v136 = vld [vmem:[#allocation3 + $0x2b8] sm:$0xff]
    %v137 = vld [vmem:[#allocation3 + $0x2c0] sm:$0xff]
    %v138 = vld [vmem:[#allocation3 + $0x2c8] sm:$0xff]
    %v139 = vld [vmem:[#allocation3 + $0x2d0] sm:$0xff]
    %v140 = vld [vmem:[#allocation3 + $0x2d8] sm:$0xff]
    %v141 = vld [vmem:[#allocation3 + $0x2e0] sm:$0xff]
    %v142 = vld [vmem:[#allocation3 + $0x2e8] sm:$0xff]
    %v143 = vld [vmem:[#allocation3 + $0x2f0] sm:$0xff]
    %v144 = vld [vmem:[#allocation3 + $0x2f8] sm:$0xff]
    %v145 = vld [vmem:[#allocation3 + $0x300] sm:$0xff]
    %v146 = vld [vmem:[#allocation3 + $0x308] sm:$0xff]
    %v147 = vld [vmem:[#allocation3 + $0x310] sm:$0xff]
    %v148 = vld [vmem:[#allocation3 + $0x318] sm:$0xff]
    %v149 = vld [vmem:[#allocation3 + $0x320] sm:$0xff]
    %v150 = vld [vmem:[#allocation3 + $0x328] sm:$0xff]
    %v151 = vld [vmem:[#allocation3 + $0x330] sm:$0xff]
    %v152 = vld [vmem:[#allocation3 + $0x338] sm:$0xff]
    %v153 = vld [vmem:[#allocation3 + $0x340] sm:$0xff]
    %v154 = vld [vmem:[#allocation3 + $0x348] sm:$0xff]
    %v155 = vld [vmem:[#allocation3 + $0x350] sm:$0xff]
    %v156 = vld [vmem:[#allocation3 + $0x358] sm:$0xff]
    %v157 = vld [vmem:[#allocation3 + $0x360] sm:$0xff]
    %v158 = vld [vmem:[#allocation3 + $0x368] sm:$0xff]
    %v159 = vld [vmem:[#allocation3 + $0x370] sm:$0xff]
    %v160 = vld [vmem:[#allocation3 + $0x378] sm:$0xff]
    %v161 = vld [vmem:[#allocation3 + $0x380] sm:$0xff]
    %v162 = vld [vmem:[#allocation3 + $0x388] sm:$0xff]
    %v163 = vld [vmem:[#allocation3 + $0x390] sm:$0xff]
    %v164 = vld [vmem:[#allocation3 + $0x398] sm:$0xff]
    %v165 = vld [vmem:[#allocation3 + $0x3a0] sm:$0xff]
    %v166 = vld [vmem:[#allocation3 + $0x3a8] sm:$0xff]
    %v167 = vld [vmem:[#allocation3 + $0x3b0] sm:$0xff]
    %v168 = vld [vmem:[#allocation3 + $0x3b8] sm:$0xff]
    %v169 = vld [vmem:[#allocation3 + $0x3c0] sm:$0xff]
    %v170 = vld [vmem:[#allocation3 + $0x3c8] sm:$0xff]
    %v171 = vld [vmem:[#allocation3 + $0x3d0] sm:$0xff]
    %v172 = vld [vmem:[#allocation3 + $0x3d8] sm:$0xff]
    %v173 = vld [vmem:[#allocation3 + $0x3e0] sm:$0xff]
    %v174 = vld [vmem:[#allocation3 + $0x3e8] sm:$0xff]
    %v175 = vld [vmem:[#allocation3 + $0x3f0] sm:$0xff]
    %v176 = vld [vmem:[#allocation3 + $0x3f8] sm:$0xff]
    %v177 = vld [vmem:[#allocation3 + $0x400] sm:$0xff]
    %v178 = vld [vmem:[#allocation3 + $0x408] sm:$0xff]
    %v179 = vld [vmem:[#allocation3 + $0x410] sm:$0xff]
    %v180 = vld [vmem:[#allocation3 + $0x418] sm:$0xff]
    %v181 = vld [vmem:[#allocation3 + $0x420] sm:$0xff]
    %v182 = vld [vmem:[#allocation3 + $0x428] sm:$0xff]
    %v183 = vld [vmem:[#allocation3 + $0x430] sm:$0xff]
    %v184 = vld [vmem:[#allocation3 + $0x438] sm:$0xff]
    %v185 = vld [vmem:[#allocation3 + $0x440] sm:$0xff]
    %v186 = vld [vmem:[#allocation3 + $0x448] sm:$0xff]
    %v187 = vld [vmem:[#allocation3 + $0x450] sm:$0xff]
    %v188 = vld [vmem:[#allocation3 + $0x458] sm:$0xff]
    %v189 = vld [vmem:[#allocation3 + $0x460] sm:$0xff]
    %v190 = vld [vmem:[#allocation3 + $0x468] sm:$0xff]
    %v191 = vld [vmem:[#allocation3 + $0x470] sm:$0xff]
    %v192 = vld [vmem:[#allocation3 + $0x478] sm:$0xff]
    %v193 = vld [vmem:[#allocation3 + $0x480] sm:$0xff]
    %v194 = vld [vmem:[#allocation3 + $0x488] sm:$0xff]
    %v195 = vld [vmem:[#allocation3 + $0x490] sm:$0xff]
    %v196 = vld [vmem:[#allocation3 + $0x498] sm:$0xff]
    %v197 = vld [vmem:[#allocation3 + $0x4a0] sm:$0xff]
    %v198 = vld [vmem:[#allocation3 + $0x4a8] sm:$0xff]
    %v199 = vld [vmem:[#allocation3 + $0x4b0] sm:$0xff]
    %v200 = vld [vmem:[#allocation3 + $0x4b8] sm:$0xff]
    %v201 = vld [vmem:[#allocation3 + $0x4c0] sm:$0xff]
    %v202 = vld [vmem:[#allocation3 + $0x4c8] sm:$0xff]
    %v203 = vld [vmem:[#allocation3 + $0x4d0] sm:$0xff]
    %v204 = vld [vmem:[#allocation3 + $0x4d8] sm:$0xff]
    %v205 = vld [vmem:[#allocation3 + $0x4e0] sm:$0xff]
    %v206 = vld [vmem:[#allocation3 + $0x4e8] sm:$0xff]
    %v207 = vld [vmem:[#allocation3 + $0x4f0] sm:$0xff]
    %v208 = vld [vmem:[#allocation3 + $0x4f8] sm:$0xff]
    %v209 = vld [vmem:[#allocation3 + $0x500] sm:$0xff]
    %v210 = vld [vmem:[#allocation3 + $0x508] sm:$0xff]
    %v211 = vld [vmem:[#allocation3 + $0x510] sm:$0xff]
    %v212 = vld [vmem:[#allocation3 + $0x518] sm:$0xff]
    %v213 = vld [vmem:[#allocation3 + $0x520] sm:$0xff]
    %v214 = vld [vmem:[#allocation3 + $0x528] sm:$0xff]
    %v215 = vld [vmem:[#allocation3 + $0x530] sm:$0xff]
    %v216 = vld [vmem:[#allocation3 + $0x538] sm:$0xff]
    %v217 = vld [vmem:[#allocation3 + $0x540] sm:$0xff]
    %v218 = vld [vmem:[#allocation3 + $0x548] sm:$0xff]
    %v219 = vld [vmem:[#allocation3 + $0x550] sm:$0xff]
    %v220 = vld [vmem:[#allocation3 + $0x558] sm:$0xff]
    %v221 = vld [vmem:[#allocation3 + $0x560] sm:$0xff]
    %v222 = vld [vmem:[#allocation3 + $0x568] sm:$0xff]
    %v223 = vld [vmem:[#allocation3 + $0x570] sm:$0xff]
    %v224 = vld [vmem:[#allocation3 + $0x578] sm:$0xff]
    %v225 = vld [vmem:[#allocation3 + $0x580] sm:$0xff]
    %v226 = vld [vmem:[#allocation3 + $0x588] sm:$0xff]
    %v227 = vld [vmem:[#allocation3 + $0x590] sm:$0xff]
    %v228 = vld [vmem:[#allocation3 + $0x598] sm:$0xff]
    %v229 = vld [vmem:[#allocation3 + $0x5a0] sm:$0xff]
    %v230 = vld [vmem:[#allocation3 + $0x5a8] sm:$0xff]
    %v231 = vld [vmem:[#allocation3 + $0x5b0] sm:$0xff]
    %v232 = vld [vmem:[#allocation3 + $0x5b8] sm:$0xff]
    %v233 = vld [vmem:[#allocation3 + $0x5c0] sm:$0xff]
    %v234 = vld [vmem:[#allocation3 + $0x5c8] sm:$0xff]
    %v235 = vld [vmem:[#allocation3 + $0x5d0] sm:$0xff]
    %v236 = vld [vmem:[#allocation3 + $0x5d8] sm:$0xff]
    %v237 = vld [vmem:[#allocation3 + $0x5e0] sm:$0xff]
    %v238 = vld [vmem:[#allocation3 + $0x5e8] sm:$0xff]
    %v239 = vld [vmem:[#allocation3 + $0x5f0] sm:$0xff]
    %v240 = vld [vmem:[#allocation3 + $0x5f8] sm:$0xff]
    %v241 = vld [vmem:[#allocation3 + $0x600] sm:$0xff]
    %v242 = vld [vmem:[#allocation3 + $0x608] sm:$0xff]
    %v243 = vld [vmem:[#allocation3 + $0x610] sm:$0xff]
    %v244 = vld [vmem:[#allocation3 + $0x618] sm:$0xff]
    %v245 = vld [vmem:[#allocation3 + $0x620] sm:$0xff]
    %v246 = vld [vmem:[#allocation3 + $0x628] sm:$0xff]
    %v247 = vld [vmem:[#allocation3 + $0x630] sm:$0xff]
    %v248 = vld [vmem:[#allocation3 + $0x638] sm:$0xff]
    %v249 = vld [vmem:[#allocation3 + $0x640] sm:$0xff]
    %v250 = vld [vmem:[#allocation3 + $0x648] sm:$0xff]
    %v251 = vld [vmem:[#allocation3 + $0x650] sm:$0xff]
    %v252 = vld [vmem:[#allocation3 + $0x658] sm:$0xff]
    %v253 = vld [vmem:[#allocation3 + $0x660] sm:$0xff]
    %v254 = vld [vmem:[#allocation3 + $0x668] sm:$0xff]
    %v255 = vld [vmem:[#allocation3 + $0x670] sm:$0xff]
    %v256 = vld [vmem:[#allocation3 + $0x678] sm:$0xff]
    %v257 = vld [vmem:[#allocation3 + $0x680] sm:$0xff]
    %v258 = vld [vmem:[#allocation3 + $0x688] sm:$0xff]
    %v259 = vld [vmem:[#allocation3 + $0x690] sm:$0xff]
    %v260 = vld [vmem:[#allocation3 + $0x698] sm:$0xff]
    %v261 = vld [vmem:[#allocation3 + $0x6a0] sm:$0xff]
    %v262 = vld [vmem:[#allocation3 + $0x6a8] sm:$0xff]
    %v263 = vld [vmem:[#allocation3 + $0x6b0] sm:$0xff]
    %v264 = vld [vmem:[#allocation3 + $0x6b8] sm:$0xff]
    %v265 = vld [vmem:[#allocation3 + $0x6c0] sm:$0xff]
    %v266 = vld [vmem:[#allocation3 + $0x6c8] sm:$0xff]
    %v267 = vld [vmem:[#allocation3 + $0x6d0] sm:$0xff]
    %v268 = vld [vmem:[#allocation3 + $0x6d8] sm:$0xff]
    %v269 = vld [vmem:[#allocation3 + $0x6e0] sm:$0xff]
    %v270 = vld [vmem:[#allocation3 + $0x6e8] sm:$0xff]
    %v271 = vld [vmem:[#allocation3 + $0x6f0] sm:$0xff]
    %v272 = vld [vmem:[#allocation3 + $0x6f8] sm:$0xff]
    %v273 = vld [vmem:[#allocation3 + $0x700] sm:$0xff]
    %v274 = vld [vmem:[#allocation3 + $0x708] sm:$0xff]
    %v275 = vld [vmem:[#allocation3 + $0x710] sm:$0xff]
    %v276 = vld [vmem:[#allocation3 + $0x718] sm:$0xff]
    %v277 = vld [vmem:[#allocation3 + $0x720] sm:$0xff]
    %v278 = vld [vmem:[#allocation3 + $0x728] sm:$0xff]
    %v279 = vld [vmem:[#allocation3 + $0x730] sm:$0xff]
    %v280 = vld [vmem:[#allocation3 + $0x738] sm:$0xff]
    %v281 = vld [vmem:[#allocation3 + $0x740] sm:$0xff]
    %v282 = vld [vmem:[#allocation3 + $0x748] sm:$0xff]
    %v283 = vld [vmem:[#allocation3 + $0x750] sm:$0xff]
    %v284 = vld [vmem:[#allocation3 + $0x758] sm:$0xff]
    %v285 = vld [vmem:[#allocation3 + $0x760] sm:$0xff]
    %v286 = vld [vmem:[#allocation3 + $0x768] sm:$0xff]
    %v287 = vld [vmem:[#allocation3 + $0x770] sm:$0xff]
    %v288 = vld [vmem:[#allocation3 + $0x778] sm:$0xff]
    %v289 = vld [vmem:[#allocation3 + $0x780] sm:$0xff]
    %v290 = vld [vmem:[#allocation3 + $0x788] sm:$0xff]
    %v291 = vld [vmem:[#allocation3 + $0x790] sm:$0xff]
    %v292 = vld [vmem:[#allocation3 + $0x798] sm:$0xff]
    %v293 = vld [vmem:[#allocation3 + $0x7a0] sm:$0xff]
    %v294 = vld [vmem:[#allocation3 + $0x7a8] sm:$0xff]
    %v295 = vld [vmem:[#allocation3 + $0x7b0] sm:$0xff]
    %v296 = vld [vmem:[#allocation3 + $0x7b8] sm:$0xff]
    %v297 = vld [vmem:[#allocation3 + $0x7c0] sm:$0xff]
    %v298 = vld [vmem:[#allocation3 + $0x7c8] sm:$0xff]
    %v299 = vld [vmem:[#allocation3 + $0x7d0] sm:$0xff]
    %v300 = vld [vmem:[#allocation3 + $0x7d8] sm:$0xff]
    %v301 = vld [vmem:[#allocation3 + $0x7e0] sm:$0xff]
    %v302 = vld [vmem:[#allocation3 + $0x7e8] sm:$0xff]
    %v303 = vld [vmem:[#allocation3 + $0x7f0] sm:$0xff]
    %v304 = vld [vmem:[#allocation3 + $0x7f8] sm:$0xff]
    %v305 = vadd.f32 %v49, %v50
    %v306 = vadd.f32 %v305, %v51
    %v307 = vadd.f32 %v306, %v52
    %v308 = vadd.f32 %v307, %v53
    %v309 = vadd.f32 %v308, %v54
    %v310 = vadd.f32 %v309, %v55
    %v311 = vadd.f32 %v310, %v56
    %v312 = vadd.f32 %v311, %v57
    %v313 = vadd.f32 %v312, %v58
    %v314 = vadd.f32 %v313, %v59
    %v315 = vadd.f32 %v314, %v60
    %v316 = vadd.f32 %v315, %v61
    %v317 = vadd.f32 %v316, %v62
    %v318 = vadd.f32 %v317, %v63
    %v319 = vadd.f32 %v318, %v64
    %v320 = vadd.f32 %v319, %v65
    %v321 = vadd.f32 %v320, %v66
    %v322 = vadd.f32 %v321, %v67
    %v323 = vadd.f32 %v322, %v68
    %v324 = vadd.f32 %v323, %v69
    %v325 = vadd.f32 %v324, %v70
    %v326 = vadd.f32 %v325, %v71
    %v327 = vadd.f32 %v326, %v72
    %v328 = vadd.f32 %v327, %v73
    %v329 = vadd.f32 %v328, %v74
    %v330 = vadd.f32 %v329, %v75
    %v331 = vadd.f32 %v330, %v76
    %v332 = vadd.f32 %v331, %v77
    %v333 = vadd.f32 %v332, %v78
    %v334 = vadd.f32 %v333, %v79
    %v335 = vadd.f32 %v334, %v80
    %v336 = vrot.slane %v335, 4
    %v337 = vadd.f32 %v335, %v336
    %v338 = vrot.slane %v337, 2
    %v339 = vadd.f32 %v337, %v338
    %v340 = vrot.slane %v339, 1
    %v341 = vadd.f32 %v339, %v340
    %v342 = vadd.f32 %v81, %v82
    %v343 = vadd.f32 %v342, %v83
    %v344 = vadd.f32 %v343, %v84
    %v345 = vadd.f32 %v344, %v85
    %v346 = vadd.f32 %v345, %v86
    %v347 = vadd.f32 %v346, %v87
    %v348 = vadd.f32 %v347, %v88
    %v349 = vadd.f32 %v348, %v89
    %v350 = vadd.f32 %v349, %v90
    %v351 = vadd.f32 %v350, %v91
    %v352 = vadd.f32 %v351, %v92
    %v353 = vadd.f32 %v352, %v93
    %v354 = vadd.f32 %v353, %v94
    %v355 = vadd.f32 %v354, %v95
    %v356 = vadd.f32 %v355, %v96
    %v357 = vadd.f32 %v356, %v97
    %v358 = vadd.f32 %v357, %v98
    %v359 = vadd.f32 %v358, %v99
    %v360 = vadd.f32 %v359, %v100
    %v361 = vadd.f32 %v360, %v101
    %v362 = vadd.f32 %v361, %v102
    %v363 = vadd.f32 %v362, %v103
    %v364 = vadd.f32 %v363, %v104
    %v365 = vadd.f32 %v364, %v105
    %v366 = vadd.f32 %v365, %v106
    %v367 = vadd.f32 %v366, %v107
    %v368 = vadd.f32 %v367, %v108
    %v369 = vadd.f32 %v368, %v109
    %v370 = vadd.f32 %v369, %v110
    %v371 = vadd.f32 %v370, %v111
    %v372 = vadd.f32 %v371, %v112
    %v373 = vrot.slane %v372, 4
    %v374 = vadd.f32 %v372, %v373
    %v375 = vrot.slane %v374, 2
    %v376 = vadd.f32 %v374, %v375
    %v377 = vrot.slane %v376, 1
    %v378 = vadd.f32 %v376, %v377
    %v379 = vadd.f32 %v113, %v114
    %v380 = vadd.f32 %v379, %v115
    %v381 = vadd.f32 %v380, %v116
    %v382 = vadd.f32 %v381, %v117
    %v383 = vadd.f32 %v382, %v118
    %v384 = vadd.f32 %v383, %v119
    %v385 = vadd.f32 %v384, %v120
    %v386 = vadd.f32 %v385, %v121
    %v387 = vadd.f32 %v386, %v122
    %v388 = vadd.f32 %v387, %v123
    %v389 = vadd.f32 %v388, %v124
    %v390 = vadd.f32 %v389, %v125
    %v391 = vadd.f32 %v390, %v126
    %v392 = vadd.f32 %v391, %v127
    %v393 = vadd.f32 %v392, %v128
    %v394 = vadd.f32 %v393, %v129
    %v395 = vadd.f32 %v394, %v130
    %v396 = vadd.f32 %v395, %v131
    %v397 = vadd.f32 %v396, %v132
    %v398 = vadd.f32 %v397, %v133
    %v399 = vadd.f32 %v398, %v134
    %v400 = vadd.f32 %v399, %v135
    %v401 = vadd.f32 %v400, %v136
    %v402 = vadd.f32 %v401, %v137
    %v403 = vadd.f32 %v402, %v138
    %v404 = vadd.f32 %v403, %v139
    %v405 = vadd.f32 %v404, %v140
    %v406 = vadd.f32 %v405, %v141
    %v407 = vadd.f32 %v406, %v142
    %v408 = vadd.f32 %v407, %v143
    %v409 = vadd.f32 %v408, %v144
    %v410 = vrot.slane %v409, 4
    %v411 = vadd.f32 %v409, %v410
    %v412 = vrot.slane %v411, 2
    %v413 = vadd.f32 %v411, %v412
    %v414 = vrot.slane %v413, 1
    %v415 = vadd.f32 %v413, %v414
    %v416 = vadd.f32 %v145, %v146
    %v417 = vadd.f32 %v416, %v147
    %v418 = vadd.f32 %v417, %v148
    %v419 = vadd.f32 %v418, %v149
    %v420 = vadd.f32 %v419, %v150
    %v421 = vadd.f32 %v420, %v151
    %v422 = vadd.f32 %v421, %v152
    %v423 = vadd.f32 %v422, %v153
    %v424 = vadd.f32 %v423, %v154
    %v425 = vadd.f32 %v424, %v155
    %v426 = vadd.f32 %v425, %v156
    %v427 = vadd.f32 %v426, %v157
    %v428 = vadd.f32 %v427, %v158
    %v429 = vadd.f32 %v428, %v159
    %v430 = vadd.f32 %v429, %v160
    %v431 = vadd.f32 %v430, %v161
    %v432 = vadd.f32 %v431, %v162
    %v433 = vadd.f32 %v432, %v163
    %v434 = vadd.f32 %v433, %v164
    %v435 = vadd.f32 %v434, %v165
    %v436 = vadd.f32 %v435, %v166
    %v437 = vadd.f32 %v436, %v167
    %v438 = vadd.f32 %v437, %v168
    %v439 = vadd.f32 %v438, %v169
    %v440 = vadd.f32 %v439, %v170
    %v441 = vadd.f32 %v440, %v171
    %v442 = vadd.f32 %v441, %v172
    %v443 = vadd.f32 %v442, %v173
    %v444 = vadd.f32 %v443, %v174
    %v445 = vadd.f32 %v444, %v175
    %v446 = vadd.f32 %v445, %v176
    %v447 = vrot.slane %v446, 4
    %v448 = vadd.f32 %v446, %v447
    %v449 = vrot.slane %v448, 2
    %v450 = vadd.f32 %v448, %v449
    %v451 = vrot.slane %v450, 1
    %v452 = vadd.f32 %v450, %v451
    %v453 = vadd.f32 %v177, %v178
    %v454 = vadd.f32 %v453, %v179
    %v455 = vadd.f32 %v454, %v180
    %v456 = vadd.f32 %v455, %v181
    %v457 = vadd.f32 %v456, %v182
    %v458 = vadd.f32 %v457, %v183
    %v459 = vadd.f32 %v458, %v184
    %v460 = vadd.f32 %v459, %v185
    %v461 = vadd.f32 %v460, %v186
    %v462 = vadd.f32 %v461, %v187
    %v463 = vadd.f32 %v462, %v188
    %v464 = vadd.f32 %v463, %v189
    %v465 = vadd.f32 %v464, %v190
    %v466 = vadd.f32 %v465, %v191
    %v467 = vadd.f32 %v466, %v192
    %v468 = vadd.f32 %v467, %v193
    %v469 = vadd.f32 %v468, %v194
    %v470 = vadd.f32 %v469, %v195
    %v471 = vadd.f32 %v470, %v196
    %v472 = vadd.f32 %v471, %v197
    %v473 = vadd.f32 %v472, %v198
    %v474 = vadd.f32 %v473, %v199
    %v475 = vadd.f32 %v474, %v200
    %v476 = vadd.f32 %v475, %v201
    %v477 = vadd.f32 %v476, %v202
    %v478 = vadd.f32 %v477, %v203
    %v479 = vadd.f32 %v478, %v204
    %v480 = vadd.f32 %v479, %v205
    %v481 = vadd.f32 %v480, %v206
    %v482 = vadd.f32 %v481, %v207
    %v483 = vadd.f32 %v482, %v208
    %v484 = vrot.slane %v483, 4
    %v485 = vadd.f32 %v483, %v484
    %v486 = vrot.slane %v485, 2
    %v487 = vadd.f32 %v485, %v486
    %v488 = vrot.slane %v487, 1
    %v489 = vadd.f32 %v487, %v488
    %v490 = vadd.f32 %v209, %v210
    %v491 = vadd.f32 %v490, %v211
    %v492 = vadd.f32 %v491, %v212
    %v493 = vadd.f32 %v492, %v213
    %v494 = vadd.f32 %v493, %v214
    %v495 = vadd.f32 %v494, %v215
    %v496 = vadd.f32 %v495, %v216
    %v497 = vadd.f32 %v496, %v217
    %v498 = vadd.f32 %v497, %v218
    %v499 = vadd.f32 %v498, %v219
    %v500 = vadd.f32 %v499, %v220
    %v501 = vadd.f32 %v500, %v221
    %v502 = vadd.f32 %v501, %v222
    %v503 = vadd.f32 %v502, %v223
    %v504 = vadd.f32 %v503, %v224
    %v505 = vadd.f32 %v504, %v225
    %v506 = vadd.f32 %v505, %v226
    %v507 = vadd.f32 %v506, %v227
    %v508 = vadd.f32 %v507, %v228
    %v509 = vadd.f32 %v508, %v229
    %v510 = vadd.f32 %v509, %v230
    %v511 = vadd.f32 %v510, %v231
    %v512 = vadd.f32 %v511, %v232
    %v513 = vadd.f32 %v512, %v233
    %v514 = vadd.f32 %v513, %v234
    %v515 = vadd.f32 %v514, %v235
    %v516 = vadd.f32 %v515, %v236
    %v517 = vadd.f32 %v516, %v237
    %v518 = vadd.f32 %v517, %v238
    %v519 = vadd.f32 %v518, %v239
    %v520 = vadd.f32 %v519, %v240
    %v521 = vrot.slane %v520, 4
    %v522 = vadd.f32 %v520, %v521
    %v523 = vrot.slane %v522, 2
    %v524 = vadd.f32 %v522, %v523
    %v525 = vrot.slane %v524, 1
    %v526 = vadd.f32 %v524, %v525
    %v527 = vadd.f32 %v241, %v242
    %v528 = vadd.f32 %v527, %v243
    %v529 = vadd.f32 %v528, %v244
    %v530 = vadd.f32 %v529, %v245
    %v531 = vadd.f32 %v530, %v246
    %v532 = vadd.f32 %v531, %v247
    %v533 = vadd.f32 %v532, %v248
    %v534 = vadd.f32 %v533, %v249
    %v535 = vadd.f32 %v534, %v250
    %v536 = vadd.f32 %v535, %v251
    %v537 = vadd.f32 %v536, %v252
    %v538 = vadd.f32 %v537, %v253
    %v539 = vadd.f32 %v538, %v254
    %v540 = vadd.f32 %v539, %v255
    %v541 = vadd.f32 %v540, %v256
    %v542 = vadd.f32 %v541, %v257
    %v543 = vadd.f32 %v542, %v258
    %v544 = vadd.f32 %v543, %v259
    %v545 = vadd.f32 %v544, %v260
    %v546 = vadd.f32 %v545, %v261
    %v547 = vadd.f32 %v546, %v262
    %v548 = vadd.f32 %v547, %v263
    %v549 = vadd.f32 %v548, %v264
    %v550 = vadd.f32 %v549, %v265
    %v551 = vadd.f32 %v550, %v266
    %v552 = vadd.f32 %v551, %v267
    %v553 = vadd.f32 %v552, %v268
    %v554 = vadd.f32 %v553, %v269
    %v555 = vadd.f32 %v554, %v270
    %v556 = vadd.f32 %v555, %v271
    %v557 = vadd.f32 %v556, %v272
    %v558 = vrot.slane %v557, 4
    %v559 = vadd.f32 %v557, %v558
    %v560 = vrot.slane %v559, 2
    %v561 = vadd.f32 %v559, %v560
    %v562 = vrot.slane %v561, 1
    %v563 = vadd.f32 %v561, %v562
    %v564 = vadd.f32 %v273, %v274
    %v565 = vadd.f32 %v564, %v275
    %v566 = vadd.f32 %v565, %v276
    %v567 = vadd.f32 %v566, %v277
    %v568 = vadd.f32 %v567, %v278
    %v569 = vadd.f32 %v568, %v279
    %v570 = vadd.f32 %v569, %v280
    %v571 = vadd.f32 %v570, %v281
    %v572 = vadd.f32 %v571, %v282
    %v573 = vadd.f32 %v572, %v283
    %v574 = vadd.f32 %v573, %v284
    %v575 = vadd.f32 %v574, %v285
    %v576 = vadd.f32 %v575, %v286
    %v577 = vadd.f32 %v576, %v287
    %v578 = vadd.f32 %v577, %v288
    %v579 = vadd.f32 %v578, %v289
    %v580 = vadd.f32 %v579, %v290
    %v581 = vadd.f32 %v580, %v291
    %v582 = vadd.f32 %v581, %v292
    %v583 = vadd.f32 %v582, %v293
    %v584 = vadd.f32 %v583, %v294
    %v585 = vadd.f32 %v584, %v295
    %v586 = vadd.f32 %v585, %v296
    %v587 = vadd.f32 %v586, %v297
    %v588 = vadd.f32 %v587, %v298
    %v589 = vadd.f32 %v588, %v299
    %v590 = vadd.f32 %v589, %v300
    %v591 = vadd.f32 %v590, %v301
    %v592 = vadd.f32 %v591, %v302
    %v593 = vadd.f32 %v592, %v303
    %v594 = vadd.f32 %v593, %v304
    %v595 = vrot.slane %v594, 4
    %v596 = vadd.f32 %v594, %v595
    %v597 = vrot.slane %v596, 2
    %v598 = vadd.f32 %v596, %v597
    %v599 = vrot.slane %v598, 1
    %v600 = vadd.f32 %v598, %v599
    %vm609 = vcmask 1041409
    %v610 = vsel %vm609, %v378, %v341
    %vm611 = vcmask 1042434
    %v612 = vsel %vm611, %v415, %v610
    %vm613 = vcmask 1043459
    %v614 = vsel %vm613, %v452, %v612
    %vm615 = vcmask 1044484
    %v616 = vsel %vm615, %v489, %v614
    %vm617 = vcmask 1045509
    %v618 = vsel %vm617, %v526, %v616
    %vm619 = vcmask 1046534
    %v620 = vsel %vm619, %v563, %v618
    %vm621 = vcmask 1047559
    %v622 = vsel %vm621, %v600, %v620
    %v624 = vadd.f32 %v48, %v622
    %625 = vst [vmem:[#allocation2] sm:$0xff] %v624
    // Predicated region
    $region26: #{tpu_custom_call.1} parent=1 // pred_check
      %p626 = pneg %p43
    $region27: #{tpu_custom_call.1} parent=1 // pred_check_branch
      %628 = sbr.rel (%p626) target = $region29
    $region28: #{tpu_custom_call.1} parent=1 // pred_region
      %v629 = vld [vmem:[#allocation2] sm:$0xff]
      %v630 = vmul.f32 %v629, 0.00390625
      %v631 = vld [vmem:[#allocation6] sm:$0xff]
      %v632 = vld [vmem:[#allocation6 + $0x8] sm:$0xff]
      %v633 = vld [vmem:[#allocation6 + $0x10] sm:$0xff]
      %v634 = vld [vmem:[#allocation6 + $0x18] sm:$0xff]
      %v635 = vld [vmem:[#allocation6 + $0x20] sm:$0xff]
      %v636 = vld [vmem:[#allocation6 + $0x28] sm:$0xff]
      %v637 = vld [vmem:[#allocation6 + $0x30] sm:$0xff]
      %v638 = vld [vmem:[#allocation6 + $0x38] sm:$0xff]
      %v639 = vld [vmem:[#allocation6 + $0x40] sm:$0xff]
      %v640 = vld [vmem:[#allocation6 + $0x48] sm:$0xff]
      %v641 = vld [vmem:[#allocation6 + $0x50] sm:$0xff]
      %v642 = vld [vmem:[#allocation6 + $0x58] sm:$0xff]
      %v643 = vld [vmem:[#allocation6 + $0x60] sm:$0xff]
      %v644 = vld [vmem:[#allocation6 + $0x68] sm:$0xff]
      %v645 = vld [vmem:[#allocation6 + $0x70] sm:$0xff]
      %v646 = vld [vmem:[#allocation6 + $0x78] sm:$0xff]
      %v647 = vld [vmem:[%s2] sm:$0x1]
      %v649 = vlaneseq
      %v650 = vshrl.u32 %v649, 7
      %v651 = vsub.s32 0, %v650
      %v652 = vrot.slane %v647, %v651
      %654 = vmatprep.subr.mxu0 0.0
      %655 = vmatpush1.msra.mxu0 %v631
      %656 = vmatprep.subr.mxu0 0.0
      %657 = vmatpush1.msra.mxu0 %v632
      %658 = vmatprep.subr.mxu0 0.0
      %659 = vmatpush1.msra.mxu0 %v633
      %660 = vmatprep.subr.mxu0 0.0
      %661 = vmatpush1.msra.mxu0 %v634
      %662 = vmatprep.subr.mxu0 0.0
      %663 = vmatpush1.msra.mxu0 %v635
      %664 = vmatprep.subr.mxu0 0.0
      %665 = vmatpush1.msra.mxu0 %v636
      %666 = vmatprep.subr.mxu0 0.0
      %667 = vmatpush1.msra.mxu0 %v637
      %668 = vmatprep.subr.mxu0 0.0
      %669 = vmatpush1.msra.mxu0 %v638
      %670 = vmatprep.subr.mxu0 0.0
      %671 = vmatpush1.msra.mxu0 %v639
      %672 = vmatprep.subr.mxu0 0.0
      %673 = vmatpush1.msra.mxu0 %v640
      %674 = vmatprep.subr.mxu0 0.0
      %675 = vmatpush1.msra.mxu0 %v641
      %676 = vmatprep.subr.mxu0 0.0
      %677 = vmatpush1.msra.mxu0 %v642
      %678 = vmatprep.subr.mxu0 0.0
      %679 = vmatpush1.msra.mxu0 %v643
      %680 = vmatprep.subr.mxu0 0.0
      %681 = vmatpush1.msra.mxu0 %v644
      %682 = vmatprep.subr.mxu0 0.0
      %683 = vmatpush1.msra.mxu0 %v645
      %684 = vmatprep.subr.mxu0 0.0
      %685 = vmatpush1.msra.mxu0 %v646
      %686 = vmatprep.subr.mxu0 0.0
      %687 = vmatpush1.msra.mxu0 0.0
      %688 = vmatprep.subr.mxu0 0.0
      %689 = vmatpush1.msra.mxu0 0.0
      %690 = vmatprep.subr.mxu0 0.0
      %691 = vmatpush1.msra.mxu0 0.0
      %692 = vmatprep.subr.mxu0 0.0
      %693 = vmatpush1.msra.mxu0 0.0
      %694 = vmatprep.subr.mxu0 0.0
      %695 = vmatpush1.msra.mxu0 0.0
      %696 = vmatprep.subr.mxu0 0.0
      %697 = vmatpush1.msra.mxu0 0.0
      %698 = vmatprep.subr.mxu0 0.0
      %699 = vmatpush1.msra.mxu0 0.0
      %700 = vmatprep.subr.mxu0 0.0
      %701 = vmatpush1.msra.mxu0 0.0
      %702 = vmatprep.subr.mxu0 0.0
      %703 = vmatpush1.msra.mxu0 0.0
      %704 = vmatprep.subr.mxu0 0.0
      %705 = vmatpush1.msra.mxu0 0.0
      %706 = vmatprep.subr.mxu0 0.0
      %707 = vmatpush1.msra.mxu0 0.0
      %708 = vmatprep.subr.mxu0 0.0
      %709 = vmatpush1.msra.mxu0 0.0
      %710 = vmatprep.subr.mxu0 0.0
      %711 = vmatpush1.msra.mxu0 0.0
      %712 = vmatprep.subr.mxu0 0.0
      %713 = vmatpush1.msra.mxu0 0.0
      %714 = vmatprep.subr.mxu0 0.0
      %715 = vmatpush1.msra.mxu0 0.0
      %716 = vmatprep.subr.mxu0 0.0
      %717 = vmatpush1.msra.mxu0 0.0
      %718 = vmatprep.mubr.f32.mxu0 0.0
      %719 = vmatmul.mubr.f32.gmra.mrb[0].mxu0 %v630
      %v720 = vpop.f32.mrb[0].mxu0
      %v721 = vadd.f32 %v652, %v720
      %v722 = vpop.f32.mrb[0].mxu0
      %723 = vdwg.mxu0
      %724 = vmax.xlane.f32.xlu0 %v721
      %v725 = vpop.xlane.xlu0 %724
      %v726 = vsub.f32 %v721, %v725
      %v727 = vmul.f32 %v726, 1.442695
      %v728 = vpow.pop %v727
      %729 = vadd.xlane.f32.xlu0 %v728
      %v730 = vpop.xlane.xlu0 %729
      %v731 = vrcp.pop %v730
      %v732 = vmul.f32 %v728, %v731
      %733 = vst [vmem:[#allocation8] sm:$0xff] %v732
    $region29: #{tpu_custom_call.1} parent=1 // pred_fallthru
      _
    // Predicated region
    $region30: #{tpu_custom_call.1} parent=1 // pred_check
      _
    $region31: #{tpu_custom_call.1} parent=1 // pred_check_branch
      %735 = sbr.rel (0) target = $region33
    $region32: #{tpu_custom_call.1} parent=1 // pred_region
      %s737 = ssub.s32 128, 128
      %738 = vsyncadd [#allocation5], %s737
      %s740 = sshll.u32 [#allocation8], 4
      %s741 = int_to_ptr.vmem [resolvable:$true] %s740
      %743 = dma.vmem_to_hbm [thread:$0]  %s741, 128, %s3, [#allocation5]
    $region33: #{tpu_custom_call.1} parent=1 // pred_fallthru
      _
    // Predicated region
    $region34: #{tpu_custom_call.1} parent=1 // pred_check
      _
    $region35: #{tpu_custom_call.1} parent=1 // pred_check_branch
      %745 = sbr.rel (0) target = $region37
    $region36: #{tpu_custom_call.1} parent=1 // pred_region
      %746 = dma.done [#allocation5], 128
    $region37: #{tpu_custom_call.1} parent=1 // pred_fallthru
      _
    %747 = vsyncpa [#allocation4], 1
    %748 = vsyncpa [#allocation7], 1
    %749 = vsyncpa [#allocation5], 1

</llo_original>
